<compile_context>
chip_gen: v7x
topology: tpu7x:2x2x1
jax: 0.10.0
libtpu: 0.0.40
codegen_flags: <defaults>
</compile_context>

<pallas_src>
import numpy as np
import jax
import jax.numpy as jnp
from jax.experimental import pallas as pl
from jax.experimental.pallas import tpu as pltpu


# ----------------------------------------------------------------------------
# Deterministic parameter init (same math as the PyTorch module's init).
# ----------------------------------------------------------------------------
def get_1d_sincos_pos_embed_from_grid(embed_dim: int, position: np.ndarray) -> np.ndarray:
    assert embed_dim % 2 == 0
    omega = np.arange(embed_dim // 2, dtype=np.float32)
    omega /= embed_dim / 2.0
    omega = 1.0 / 10000 ** omega
    position = position.reshape(-1)
    out = np.einsum("m,d->md", position, omega)
    return np.concatenate([np.sin(out), np.cos(out)], axis=1)


def make_var_embed_params(default_vars, embed_dim):
    """Returns (var_embed_table (1, V, D) float32, var_map dict)."""
    var_embed = get_1d_sincos_pos_embed_from_grid(
        embed_dim, np.arange(len(default_vars))
    ).astype(np.float32)[None, :, :]                      # (1, V, D)
    var_map = {v: i for i, v in enumerate(default_vars)}
    return jnp.asarray(var_embed), var_map


# ----------------------------------------------------------------------------
# Kernels: pure VPU broadcast-adds (mem-bound, lane-dense stores).
# ----------------------------------------------------------------------------
def _add_kernel_2d(x_ref, emb_ref, o_ref):
    # x_ref/o_ref: (tb, tf);  emb_ref: (1, tf) broadcast over the sublane axis.
    o_ref[...] = (x_ref[...] + emb_ref[...]).astype(o_ref.dtype)


def _add_kernel_4d(x_ref, emb_ref, o_ref):
    # x_ref/o_ref: (tb, C, tl, D);  emb_ref: (C, D) broadcast over batch & tokens.
    o_ref[...] = (x_ref[...] + emb_ref[...][None, :, None, :]).astype(o_ref.dtype)


# ----------------------------------------------------------------------------
# Hardware-aware tiling helpers.
# ----------------------------------------------------------------------------
def _vmem_capacity_bytes():
    try:
        info = pltpu.get_tpu_info()
        for name in ("vmem_capacity_bytes", "vmem_size_bytes", "vmem_bytes"):
            cap = getattr(info, name, None)
            if cap:
                return int(cap)
    except Exception:
        pass
    return 64 * 1024 * 1024     # conservative fallback: v7x per-TC VMEM


def _sublane_multiple(dtype):
    # Sublane packing: 8 rows for f32, 16 for bf16/f16, 32 for int8/fp8.
    return max(8, 32 // np.dtype(dtype).itemsize)


def _round_up(n, m):
    return ((n + m - 1) // m) * m


def _choose_tiles_2d(B, F, itemsize, target, smult):
    """Pick (tb, tf) for the flattened (B, F) layout."""
    row_bytes = F * itemsize
    if row_bytes <= target:
        tf = F
        rows = max(1, target // row_bytes)
        if rows >= B or B <= smult:
            tb = B                                         # full dim (always legal)
        else:
            tb = min(B, max(smult, (rows // smult) * smult))
    else:
        tb = B if B <= smult else smult
        lanes = (target // (tb * itemsize)) // 128 * 128
        tf = min(F, max(128, lanes))                       # multiple of 128 (or full F)
    # Guarantee >= 2 grid steps so v7x can shard across both TensorCores.
    if pl.cdiv(B, tb) * pl.cdiv(F, tf) == 1:
        if F >= 256:
            tf = max(128, _round_up(F // 2, 128))
        elif B > smult:
            tb = _round_up(B // 2, smult)
    return tb, tf


def _choose_tiles_4d(B, C, L, D, itemsize, target, smult):
    """Pick (tb, tl) for the (B, C, L, D) layout (D a multiple of 128)."""
    sample_bytes = C * L * D * itemsize
    if sample_bytes <= target:
        tl = L
        tb = max(1, min(B, target // sample_bytes))
    else:
        tb = 1
        rows = max(1, target // (C * D * itemsize))
        tl = min(L, max(smult, (rows // smult) * smult))   # multiple of smult or full L
    # Guarantee >= 2 grid steps for v7x megacore.
    if pl.cdiv(B, tb) * pl.cdiv(L, tl) == 1:
        if B >= 2:
            tb = (B + 1) // 2        # batch dim is not in the last-two dims -> any int ok
        elif L >= 2 * smult:
            tl = max(smult, ((L // 2) // smult) * smult)
    return tb, tl


# ----------------------------------------------------------------------------
# Forward wrapper.
# ----------------------------------------------------------------------------
def var_embed_forward(x, in_vars, var_embed_table):
    """Pallas equivalent of VarEmbed.forward.

    x:               (B, C, L, D)  — batch, variable-channels, tokens, embed dim
    in_vars:         (1, C) or (C,) int — variable id per channel of x
    var_embed_table: (1, V, D) float32  — the learnable table (sin/cos init)
    """
    B, C, L, D = x.shape
    V = var_embed_table.shape[-2]
    table = var_embed_table.reshape(V, D)

    # Output dtype follows torch promotion (x + float32 parameter).
    out_dtype = jnp.result_type(x.dtype, table.dtype)

    # --- wrapper-side gather (tiny: C*D floats) ------------------------------
    # NOTE: out-of-range ids are clamped to valid rows; PyTorch would raise.
    iv = jnp.clip(jnp.asarray(in_vars, jnp.int32).reshape(-1), 0, V - 1)   # (C,)
    emb = table[iv]                                                        # (C, D) f32

    vmem_cap = _vmem_capacity_bytes()
    target = max(1 << 20, min(8 << 20, vmem_cap // 10))    # ~6.4 MiB v7x, 8 MiB v5e/v6e
    smult = _sublane_multiple(x.dtype)
    in_sz = np.dtype(x.dtype).itemsize
    out_sz = np.dtype(out_dtype).itemsize
    emb_sz = np.dtype(emb.dtype).itemsize
    tile_sz = max(in_sz, out_sz)

    # Alias x to the output only when dtypes match (in-place-compatible add).
    io_alias = {0: 0} if np.dtype(x.dtype) == np.dtype(out_dtype) else {}

    if D % 128 == 0:
        # ---- Path A: 4-D blocks, emb stays (C, D); broadcast in-kernel ------
        tb, tl = _choose_tiles_4d(B, C, L, D, tile_sz, target, smult)
        nb, nl = pl.cdiv(B, tb), pl.cdiv(L, tl)
        blk_elems = tb * C * tl * D
        emb_bytes = C * D * emb_sz
        grid = (nb, nl)
        in_specs = [
            pl.BlockSpec((tb, C, tl, D), lambda b, l: (b, 0, l, 0)),
            pl.BlockSpec((C, D), lambda b, l: (0, 0)),
        ]
        out_spec = pl.BlockSpec((tb, C, tl, D), lambda b, l: (b, 0, l, 0))
        kernel = _add_kernel_4d
        x_in, emb_in = x, emb
        out_shape = jax.ShapeDtypeStruct((B, C, L, D), out_dtype)
        final_reshape = None
    else:
        # ---- Path B: flatten to (B, C*L*D): no C<8 sublane padding, one -----
        # contiguous DMA per block, lane-dense (>=128) stores.
        F = C * L * D
        emb_slab = jnp.broadcast_to(emb[:, None, :], (C, L, D)).reshape(1, F)
        tb, tf = _choose_tiles_2d(B, F, tile_sz, target, smult)
        nb, nf = pl.cdiv(B, tb), pl.cdiv(F, tf)
        blk_elems = tb * tf
        emb_bytes = tf * emb_sz
        # Batch is the inner grid axis -> emb block index constant over it, so
        # the emb slab is fetched only nf (usually 1-2) times total.
        grid = (nf, nb)
        in_specs = [
            pl.BlockSpec((tb, tf), lambda f, b: (b, f)),
            pl.BlockSpec((1, tf), lambda f, b: (0, f)),
        ]
        out_spec = pl.BlockSpec((tb, tf), lambda f, b: (b, f))
        kernel = _add_kernel_2d
        x_in, emb_in = x.reshape(B, F), emb_slab
        out_shape = jax.ShapeDtypeStruct((B, F), out_dtype)
        final_reshape = (B, C, L, D)

    # Generation-aware scoped-VMEM budget: double-buffered in + out tiles plus
    # the emb operand, with margin, clamped under physical capacity.
    vmem_needed = 2 * blk_elems * (in_sz + out_sz) + 2 * emb_bytes
    vmem_limit = max(vmem_needed + (4 << 20), 16 << 20)
    vmem_limit = min(vmem_limit, vmem_cap - (8 << 20))
    vmem_limit = int(max(vmem_limit, vmem_needed + (1 << 20)))

    out = pl.pallas_call(
        kernel,
        out_shape=out_shape,
        grid=grid,
        in_specs=in_specs,
        out_specs=out_spec,
        input_output_aliases=io_alias,
        compiler_params=pltpu.CompilerParams(
            dimension_semantics=("parallel", "parallel"),
            vmem_limit_bytes=vmem_limit,
        ),
    )(x_in, emb_in)

    return out if final_reshape is None else out.reshape(final_reshape)


# ----------------------------------------------------------------------------
# Demo / self-check
# ----------------------------------------------------------------------------
if __name__ == "__main__":
    key = jax.random.PRNGKey(0)
    k1, k2 = jax.random.split(key)

    # --- Case 1: D < 128 -> flattened lane-dense path ------------------------
    default_vars = ["rho", "u", "v", "pressure"]        # V = 4
    embed_dim = 32                                       # D
    B, C, L, D = 2, 4, 8, embed_dim
    table, var_map = make_var_embed_params(default_vars, embed_dim)
    x = jax.random.normal(k1, (B, C, L, D), dtype=jnp.float32)
    in_vars = jnp.array([[var_map["v"], var_map["rho"],
                          var_map["pressure"], var_map["u"]]], dtype=jnp.int32)

    out = jax.block_until_ready(jax.jit(var_embed_forward)(x, in_vars, table))

    gathered = table[0][in_vars.reshape(-1)]             # (C, D)
    ref = x + gathered[None, :, None, :]                 # (B, C, L, D)
    assert out.shape == ref.shape and out.dtype == ref.dtype
    np.testing.assert_allclose(np.asarray(out), np.asarray(ref), rtol=1e-6, atol=1e-6)

    # --- Case 2: D % 128 == 0 -> 4-D path (no token broadcast of emb) --------
    default_vars2 = ["rho", "u", "v"]                    # V = 3
    B2, C2, L2, D2 = 2, 3, 16, 128
    table2, var_map2 = make_var_embed_params(default_vars2, D2)
    x2 = jax.random.normal(k2, (B2, C2, L2, D2), dtype=jnp.float32)
    in_vars2 = jnp.array([[var_map2["u"], var_map2["rho"], var_map2["v"]]],
                         dtype=jnp.int32)

    out2 = jax.block_until_ready(jax.jit(var_embed_forward)(x2, in_vars2, table2))

    gathered2 = table2[0][in_vars2.reshape(-1)]
    ref2 = x2 + gathered2[None, :, None, :]
    assert out2.shape == ref2.shape and out2.dtype == ref2.dtype
    np.testing.assert_allclose(np.asarray(out2), np.asarray(ref2), rtol=1e-6, atol=1e-6)

    print("KERNEL_OK")
</pallas_src>

<mosaic_0001>
module attributes {stable_mosaic.version = 11 : i64} {
  func.func @_add_kernel_2d(%arg0: i32, %arg1: i32, %arg2: memref<2x512xf32, #tpu.memory_space<vmem>>, %arg3: memref<1x512xf32, #tpu.memory_space<vmem>>, %arg4: memref<2x512xf32, #tpu.memory_space<vmem>>) attributes {dimension_semantics = [#tpu.dimension_semantics<parallel>, #tpu.dimension_semantics<parallel>], iteration_bounds = array<i64: 2, 1>, scalar_prefetch = 0 : i64, scratch_operands = 0 : i64, tpu.core_type = #tpu.core_type<tc>, window_params = [{transform_indices = @transform_0, window_bounds = array<i64: 2, 512>}, {transform_indices = @transform_1, window_bounds = array<i64: 1, 512>}, {transform_indices = @transform_2, window_bounds = array<i64: 2, 512>}]} {
    %c0 = arith.constant 0 : index
    %c0_0 = arith.constant 0 : index
    %0 = vector.load %arg2[%c0, %c0_0] : memref<2x512xf32, #tpu.memory_space<vmem>>, vector<2x512xf32>
    %c0_1 = arith.constant 0 : index
    %c0_2 = arith.constant 0 : index
    %1 = vector.load %arg3[%c0_1, %c0_2] : memref<1x512xf32, #tpu.memory_space<vmem>>, vector<1x512xf32>
    %2 = vector.broadcast %1 : vector<1x512xf32> to vector<2x512xf32>
    %3 = arith.addf %0, %2 : vector<2x512xf32>
    %c0_3 = arith.constant 0 : index
    %c0_4 = arith.constant 0 : index
    %4 = vector.load %arg4[%c0_3, %c0_4] : memref<2x512xf32, #tpu.memory_space<vmem>>, vector<2x512xf32>
    tpu.vector_store %arg4[%c0_3, %c0_4], %3 {strides = array<i32>} : memref<2x512xf32, #tpu.memory_space<vmem>>, vector<2x512xf32>,
    return
  }
  func.func @transform_0(%arg0: i32, %arg1: i32) -> (i32, i32) {
    %c0_i32 = arith.constant 0 : i32
    return %arg1, %arg0 : i32, i32
  }
  func.func @transform_1(%arg0: i32, %arg1: i32) -> (i32, i32) {
    %c0_i32 = arith.constant 0 : i32
    %c0_i32_0 = arith.constant 0 : i32
    return %c0_i32, %arg0 : i32, i32
  }
  func.func @transform_2(%arg0: i32, %arg1: i32) -> (i32, i32) {
    %c0_i32 = arith.constant 0 : i32
    return %arg1, %arg0 : i32, i32
  }
}

</mosaic_0001>

<llo_original>
// kernel: var_embed_forward.1
$region0: #{var_embed_forward.1}
  #allocation0 [shape = 'u32[]', space=smem, size = 0x4, offset = 0x4, fixed_abs, tag = 'smem constant byte address 0x4 - core index']
  #allocation1 [shape = 'u32[144,128]{1,0:T(1,128)}', space=vmem, size = 0x12000, scoped, tag = 'internal scratch']
  %s0 = inlined_call_operand.vmem [shape: f32[2,1024], index: 0, kind: input, shape index: {}, may-alias: {0,2}]
  %s1 = inlined_call_operand.vmem [shape: f32[1,1024], index: 1, kind: input, shape index: {}]
  %s2 = inlined_call_operand.vmem [shape: f32[2,1024], index: 2, kind: output, shape index: {}, may-alias: {0,2}]
  %s3 = sld [smem:[#allocation0]]
  $region41: #{var_embed_forward.1} parent=0
    _
  %s5 = ssub.s32 1, %s3
  %s6 = scalar_select 0, %s5, %s3
  loop: start=0, step=1, limit=4
  $region2: #{var_embed_forward.1} parent=0 // loop_pre_header
    _
  $region3: #{var_embed_forward.1} parent=0 // loop_header
    %s8 = sphi 0, %s12
    %p9 = scmp.ge.s32.totalorder %s8, 4
    %s15 = sphi 0, %s27
    %s16 = sphi 0, %s23
    %s17 = sphi 0, %s15
    %s18 = sphi 0, %s16
    %s19 = sphi 0, %s17
    %s20 = sphi 0, %s18
    %s32 = sphi 0, %s34
    %s35 = sphi 0, %s32
    %s36 = sphi 0, %s35
    %s52 = sphi 0, %s36
    %s58 = sphi 0, %s60
    %s61 = sphi 0, %s58
    %s62 = sphi 0, %s61
    %s78 = sphi 0, %s62
    %s86 = sphi 0, %s88
    %s89 = sphi 0, %s86
    %s90 = sphi 0, %s89
    %s106 = sphi 0, %s90
  $region4: #{var_embed_forward.1} parent=0 // loop_header_branch
    %11 = sbr.rel (%p9) target = $region8
  $region5: #{var_embed_forward.1} parent=0 // loop_body
    %s13 = ssub.s32 %s8, 1
    %s14 = ssub.s32 %s8, 2
    %s21 = sadd.s32 1, %s16
    %p22 = scmp.ge.s32.totalorder %s21, 1
    %s23 = scalar_select %p22, 0, %s21
    %s24 = sadd.s32 1, %s15
    %s25 = scalar_select %p22, %s24, %s15
    %p26 = scmp.ge.s32.totalorder %s25, 2
    %s27 = scalar_select %p26, 0, %s25
    %s28 = ssub.s32 %s16, %s23
    %s29 = ssub.s32 %s15, %s27
    %s30 = sor.u32 %s28, %s29
    %p31 = scmp.eq.s32.totalorder %s30, 0
    %s33 = sadd.s32 %s32, 1
    %s34 = scalar_select %p31, %s32, %s33
    %p37 = pneg %p31
    %p38 = scmp.eq.s32.totalorder %s8, 1
    %p39 = por %p37, %p38
    %p40 = scmp.ne.s32.totalorder %s32, %s35
    %p41 = scmp.eq.s32.totalorder %s8, 0
    %p42 = por %p40, %p41
    %p43 = scmp.ne.s32.totalorder %s32, %s35
    %p44 = scmp.eq.s32.totalorder %s13, 1
    %p45 = por %p43, %p44
    %p46 = scmp.ne.s32.totalorder %s35, %s36
    %p47 = scmp.eq.s32.totalorder %s13, 0
    %p48 = por %p46, %p47
    %p49 = scmp.ne.s32.totalorder %s35, %s36
    %p50 = scmp.eq.s32.totalorder %s14, 1
    %p51 = por %p49, %p50
    %p53 = scmp.ne.s32.totalorder %s36, %s52
    %p54 = scmp.eq.s32.totalorder %s14, 0
    %p55 = por %p53, %p54
    %s56 = ssub.s32 %s15, %s27
    %p57 = scmp.eq.s32.totalorder %s56, 0
    %s59 = sadd.s32 %s58, 1
    %s60 = scalar_select %p57, %s58, %s59
    %p63 = pneg %p57
    %p64 = scmp.eq.s32.totalorder %s8, 1
    %p65 = por %p63, %p64
    %p66 = scmp.ne.s32.totalorder %s58, %s61
    %p67 = scmp.eq.s32.totalorder %s8, 0
    %p68 = por %p66, %p67
    %p69 = scmp.ne.s32.totalorder %s58, %s61
    %p70 = scmp.eq.s32.totalorder %s13, 1
    %p71 = por %p69, %p70
    %p72 = scmp.ne.s32.totalorder %s61, %s62
    %p73 = scmp.eq.s32.totalorder %s13, 0
    %p74 = por %p72, %p73
    %p75 = scmp.ne.s32.totalorder %s61, %s62
    %p76 = scmp.eq.s32.totalorder %s14, 1
    %p77 = por %p75, %p76
    %p79 = scmp.ne.s32.totalorder %s62, %s78
    %p80 = scmp.eq.s32.totalorder %s14, 0
    %p81 = por %p79, %p80
    %s82 = ssub.s32 %s16, %s23
    %s83 = ssub.s32 %s15, %s27
    %s84 = sor.u32 %s82, %s83
    %p85 = scmp.eq.s32.totalorder %s84, 0
    %s87 = sadd.s32 %s86, 1
    %s88 = scalar_select %p85, %s86, %s87
    %p91 = pneg %p85
    %p92 = scmp.eq.s32.totalorder %s8, 1
    %p93 = por %p91, %p92
    %p94 = scmp.ne.s32.totalorder %s86, %s89
    %p95 = scmp.eq.s32.totalorder %s8, 0
    %p96 = por %p94, %p95
    %p97 = scmp.ne.s32.totalorder %s86, %s89
    %p98 = scmp.eq.s32.totalorder %s13, 1
    %p99 = por %p97, %p98
    %p100 = scmp.ne.s32.totalorder %s89, %s90
    %p101 = scmp.eq.s32.totalorder %s13, 0
    %p102 = por %p100, %p101
    %p103 = scmp.ne.s32.totalorder %s89, %s90
    %p104 = scmp.eq.s32.totalorder %s14, 1
    %p105 = por %p103, %p104
    %p107 = scmp.ne.s32.totalorder %s90, %s106
    %p108 = scmp.eq.s32.totalorder %s14, 0
    %p109 = por %p107, %p108
    %p110 = scmp.le.s32.totalorder 1, %s8
    %p111 = scmp.lt.s32.totalorder %s8, 3
    %p112 = pnand %p110, %p111
    %p113 = pneg %p112
    // Predicated region
    $region9: #{var_embed_forward.1} parent=5 // pred_check
      _
    $region10: #{var_embed_forward.1} parent=5 // pred_check_branch
      %115 = sbr.rel (%p112) target = $region12
    $region11: #{var_embed_forward.1} parent=5 // pred_region
      %s116 = ssub.s32 %s8, 1
    $region12: #{var_embed_forward.1} parent=5 // pred_fallthru
      _
    %p117 = scmp.lt.s32.totalorder %s8, 2
    // Predicated region
    $region13: #{var_embed_forward.1} parent=5 // pred_check
      %p118 = pneg %p117
    $region14: #{var_embed_forward.1} parent=5 // pred_check_branch
      %120 = sbr.rel (%p118) target = $region16
    $region15: #{var_embed_forward.1} parent=5 // pred_region
      // Predicated region
      $region17: #{var_embed_forward.1} parent=15 // pred_check
        %p121 = pneg %p42
      $region18: #{var_embed_forward.1} parent=15 // pred_check_branch
        %123 = sbr.rel (%p121) target = $region20
      $region19: #{var_embed_forward.1} parent=15 // pred_region
        %s124 = smul.u32 4, %s15
        %p125 = scmp.lt.s32.totalorder %s16, 0
        %s126 = scalar_select %p125, %s16, 0
        %p127 = scmp.lt.s32.totalorder %s124, 7
        %s128 = scalar_select %p127, %s124, 7
        %s129 = smul.addr %s126, 8
        %s130 = sadd.s32 %s128, %s129
        %s131 = smul.addr %s130, 2
        %s132 = scalar_lea.vmem %s0, %s131
        %s133 = smul.u32 4, %s15
      $region20: #{var_embed_forward.1} parent=15 // pred_fallthru
        _
      // Predicated region
      $region21: #{var_embed_forward.1} parent=15 // pred_check
        %p134 = pneg %p68
      $region22: #{var_embed_forward.1} parent=15 // pred_check_branch
        %136 = sbr.rel (%p134) target = $region24
      $region23: #{var_embed_forward.1} parent=15 // pred_region
        %s137 = smul.u32 4, %s15
        %p138 = scmp.lt.s32.totalorder %s137, 7
        %s139 = scalar_select %p138, %s137, 7
        %s140 = scalar_lea.vmem %s1, %s139
        %s141 = smul.u32 4, %s15
      $region24: #{var_embed_forward.1} parent=15 // pred_fallthru
        _
    $region16: #{var_embed_forward.1} parent=5 // pred_fallthru
      _
    %p142 = scmp.le.s32.totalorder 1, %s8
    %p143 = scmp.lt.s32.totalorder %s8, 3
    %p144 = pnand %p142, %p143
    %p145 = pneg %p144
    // Predicated region
    $region25: #{var_embed_forward.1} parent=5 // pred_check
      _
    $region26: #{var_embed_forward.1} parent=5 // pred_check_branch
      %147 = sbr.rel (%p144) target = $region28
    $region27: #{var_embed_forward.1} parent=5 // pred_region
      %s148 = ssub.s32 %s8, 1
      %s149 = smul.u32 4, %s17
      %p150 = scmp.lt.s32.totalorder %s18, 0
      %s151 = scalar_select %p150, %s18, 0
      %p152 = scmp.lt.s32.totalorder %s149, 7
      %s153 = scalar_select %p152, %s149, 7
      %s154 = smul.addr %s151, 8
      %s155 = sadd.s32 %s153, %s154
      %s156 = smul.addr %s155, 2
      %s157 = scalar_lea.vmem %s0, %s156
      %p158 = pneg %p48
      %p159 = pneg %p45
      %s160 = smul.u32 4, %s17
      %p161 = scmp.lt.s32.totalorder %s160, 7
      %s162 = scalar_select %p161, %s160, 7
      %s163 = scalar_lea.vmem %s1, %s162
      %p164 = pneg %p74
      %p165 = pneg %p71
      %p166 = pneg %p102
      %p167 = pneg %p99
      %s168 = smul.u32 4, %s17
      %p169 = scmp.lt.s32.totalorder %s18, 0
      %s170 = scalar_select %p169, %s18, 0
      %p171 = scmp.lt.s32.totalorder %s168, 7
      %s172 = scalar_select %p171, %s168, 7
      %s173 = smul.addr %s170, 8
      %s174 = sadd.s32 %s172, %s173
      %s175 = smul.addr %s174, 2
      %s176 = scalar_lea.vmem %s2, %s175
      %s177 = smul.u32 4, %s17
      %p178 = scmp.lt.s32.totalorder %s18, 0
      %s179 = scalar_select %p178, %s18, 0
      %p180 = scmp.lt.s32.totalorder %s177, 7
      %s181 = scalar_select %p180, %s177, 7
      %s182 = smul.addr %s179, 8
      %s183 = sadd.s32 %s181, %s182
      %s184 = smul.addr %s183, 2
      %s185 = scalar_lea.vmem %s0, %s184
      %s186 = smul.u32 4, %s17
      %s187 = smul.u32 4, %s17
      %p188 = scmp.lt.s32.totalorder %s187, 7
      %s189 = scalar_select %p188, %s187, 7
      %s190 = scalar_lea.vmem %s1, %s189
      %s191 = smul.u32 4, %s17
      %s192 = smul.u32 4, %s17
      %p193 = scmp.lt.s32.totalorder %s18, 0
      %s194 = scalar_select %p193, %s18, 0
      %p195 = scmp.lt.s32.totalorder %s192, 7
      %s196 = scalar_select %p195, %s192, 7
      %s197 = smul.addr %s194, 8
      %s198 = sadd.s32 %s196, %s197
      %s199 = smul.addr %s198, 2
      %s200 = scalar_lea.vmem %s2, %s199
      %s201 = smul.u32 4, %s17
      %v202 = vld [vmem:[%s185] sm:$0xff]
      %v203 = vld [vmem:[%s190] sm:$0xf]
      %v205 = vlaneseq
      %v206 = vshrl.u32 %v205, 7
      %v207 = vsub.s32 0, %v206
      %v208 = vrot.slane %v203, %v207
      %v209 = vlaneseq
      %v210 = vshrl.u32 %v209, 7
      %v211 = vsub.s32 1, %v210
      %v212 = vrot.slane %v203, %v211
      %v213 = vlaneseq
      %v214 = vshrl.u32 %v213, 7
      %v215 = vsub.s32 2, %v214
      %v216 = vrot.slane %v203, %v215
      %v217 = vlaneseq
      %v218 = vshrl.u32 %v217, 7
      %v219 = vsub.s32 3, %v218
      %v220 = vrot.slane %v203, %v219
      %v221 = vcombine.low %v208, %v212
      %v222 = vcombine.low %v216, %v220
      %v224 = vunpack.c.l.s4 1983009808
      %v225 = vunpack.c.0.s8 %v224
      %v226 = vlaneseq
      %v227 = vshrl.u32 %v226, 7
      %v228 = vsub.s32 %v225, %v227
      %v229 = vrot.slane %v221, %v228
      %v231 = vunpack.c.l.s4 1983009808
      %v232 = vunpack.c.0.s8 %v231
      %v233 = vlaneseq
      %v234 = vshrl.u32 %v233, 7
      %v235 = vsub.s32 %v232, %v234
      %v236 = vrot.slane %v222, %v235
      %v237 = vcombine.low %v229, %v236
      %v239 = vadd.f32 %v202, %v237
      %240 = vst [vmem:[%s200] sm:$0xff] %v239
      %s241 = smul.u32 4, %s17
      %p242 = scmp.lt.s32.totalorder %s18, 0
      %s243 = scalar_select %p242, %s18, 0
      %p244 = scmp.lt.s32.totalorder %s241, 7
      %s245 = scalar_select %p244, %s241, 7
      %s246 = smul.addr %s243, 8
      %s247 = sadd.s32 %s245, %s246
      %s248 = smul.addr %s247, 2
      %s249 = scalar_lea.vmem %s2, %s248
      // Predicated region
      $region29: #{var_embed_forward.1} parent=27 // pred_check
        %p250 = pneg %p99
      $region30: #{var_embed_forward.1} parent=27 // pred_check_branch
        %252 = sbr.rel (%p250) target = $region32
      $region31: #{var_embed_forward.1} parent=27 // pred_region
        %s253 = smul.u32 4, %s17
      $region32: #{var_embed_forward.1} parent=27 // pred_fallthru
        _
    $region28: #{var_embed_forward.1} parent=5 // pred_fallthru
      _
    %p254 = scmp.le.s32.totalorder 2, %s8
    // Predicated region
    $region33: #{var_embed_forward.1} parent=5 // pred_check
      %p255 = pneg %p254
    $region34: #{var_embed_forward.1} parent=5 // pred_check_branch
      %257 = sbr.rel (%p255) target = $region36
    $region35: #{var_embed_forward.1} parent=5 // pred_region
      %s258 = ssub.s32 %s8, 2
      // Predicated region
      $region37: #{var_embed_forward.1} parent=35 // pred_check
        %p259 = pneg %p105
      $region38: #{var_embed_forward.1} parent=35 // pred_check_branch
        %261 = sbr.rel (%p259) target = $region40
      $region39: #{var_embed_forward.1} parent=35 // pred_region
        %s262 = smul.u32 4, %s19
        %p263 = scmp.lt.s32.totalorder %s20, 0
        %s264 = scalar_select %p263, %s20, 0
        %p265 = scmp.lt.s32.totalorder %s262, 7
        %s266 = scalar_select %p265, %s262, 7
        %s267 = smul.addr %s264, 8
        %s268 = sadd.s32 %s266, %s267
        %s269 = smul.addr %s268, 2
        %s270 = scalar_lea.vmem %s2, %s269
      $region40: #{var_embed_forward.1} parent=35 // pred_fallthru
        _
    $region36: #{var_embed_forward.1} parent=5 // pred_fallthru
      _
  $region6: #{var_embed_forward.1} parent=0 // loop_footer
    %s12 = sadd.s32 1, %s8
  $region7: #{var_embed_forward.1} parent=0 // loop_footer_branch
    %7 = sbr.rel target = $region3
  $region8: #{var_embed_forward.1} parent=0 // loop_exit
    _

</llo_original>
